<compile_context>
chip_gen: v6e
topology: v6e:2x2x1
jax: 0.10.0
libtpu: 0.0.40
codegen_flags: <defaults>
</compile_context>

<pallas_src>
import functools

import jax
import jax.numpy as jnp
from jax import lax
from jax.experimental import pallas as pl
from jax.experimental.pallas import tpu as pltpu

_LANE = 128          # TPU vreg lane width
_SUBLANE = 8
_MAX_TM = 8192       # rows per tile upper bound (VMEM budget may lower it)
_MAX_S_CHUNK = 2048  # lanes per reduction-axis chunk (independent of S)
_STRIP = 64          # rows per vreg-resident accumulation strip


def _round_up(x: int, m: int) -> int:
    return (x + m - 1) // m * m


def _vmem_limit_bytes() -> int:
    """Scoped-VMEM request.  Conservative: never assume the reported capacity
    is per-TensorCore (dual-core parts may report per-chip), cap at 48 MiB."""
    try:
        cap = int(pltpu.get_tpu_info().vmem_capacity_bytes)
    except Exception:
        cap = 64 << 20
    return max(16 << 20, min(cap // 2, 48 << 20))


def _num_tensorcores() -> int:
    """Best-effort TensorCore count (megacore grid sharding).  Defaults to 1,
    which is exact for v5e/v6e and merely conservative on dual-core chips."""
    try:
        info = pltpu.get_tpu_info()
        for name in ("num_cores", "core_count", "num_tensorcores",
                     "tensorcore_count"):
            v = getattr(info, name, None)
            if v:
                return max(1, int(v))
    except Exception:
        pass
    try:
        dev = jax.devices()[0]
        for name in ("num_cores", "core_count"):
            v = getattr(dev, name, None)
            if isinstance(v, int) and v > 0:
                return v
    except Exception:
        pass
    return 1


def _choose_tiles(m: int, s: int, elem: int, vmem_limit: int, n_cores: int):
    """Pick (tm, sc).  sc is ~2048 lanes regardless of divisibility; tm is
    derived from an explicit VMEM budget (double-buffered input tile + f32
    accumulator + double-buffered (tm,1) output) and clamped to the data."""
    sc = min(_MAX_S_CHUNK, _round_up(s, _LANE))
    per_row = 2 * sc * elem + _LANE * 4 + 2 * 4
    budget = vmem_limit - (2 << 20)            # headroom for constants/temps
    tm = max(_LANE, (budget // per_row) // _LANE * _LANE)
    tm = min(tm, _MAX_TM)
    tm = min(tm, _round_up(m, _LANE))          # don't tile past the data
    if n_cores > 1:
        # Keep >= n_cores row tiles so the "parallel" axis load-balances
        # across TensorCores; skipped on single-core chips.
        tm = min(tm, max(_LANE, _round_up(pl.cdiv(m, n_cores), _LANE)))
    return tm, sc


def _accum_chunk_vpu(x_ref, acc_ref, *, groups, rem, strip):
    """Add `groups` full 128-lane groups (plus a masked `rem`-lane partial
    group) of the current (tm, sc) tile into the (tm, 128) f32 accumulator.

    Rows are processed in `strip`-row sublane strips so the running partial
    stays vreg-resident (no spilled (tm,128) loop carry); the accumulator is
    read-modify-written exactly once per strip."""
    if groups == 0 and rem == 0:
        return
    tm = acc_ref.shape[0]
    if rem > 0:
        lane = lax.broadcasted_iota(jnp.int32, (strip, _LANE), 1)
        tail_mask = lane < rem                       # hoisted out of the loop

    def strip_body(s, carry):
        r0 = pl.multiple_of(s * strip, strip)
        rows = pl.ds(r0, strip)
        part = None
        for g in range(groups):                      # unrolled lane groups
            v = x_ref[rows, pl.ds(g * _LANE, _LANE)].astype(jnp.float32)
            part = v if part is None else part + v
        if rem > 0:
            v = x_ref[rows, pl.ds(groups * _LANE, _LANE)].astype(jnp.float32)
            v = jnp.where(tail_mask, v, 0.0)         # select => NaN-garbage safe
            part = v if part is None else part + v
        acc_ref[rows, :] += part
        return carry

    lax.fori_loop(0, tm // strip, strip_body, 0, unroll=False)


def _accum_chunk_mxu(x_ref, acc_ref, *, sc):
    """bf16 fast path: the lane reduction rides the MXU (x @ ones with f32
    accumulation), leaving the VPU / load-store pipeline and the XLU free.
    Only used when every chunk is full (no OOB lanes reach the multiply)."""
    ones = jnp.ones((sc, _LANE), x_ref.dtype)
    acc_ref[...] += jnp.dot(x_ref[...], ones, preferred_element_type=jnp.float32)


def _gap_kernel(x_ref, o_ref, acc_ref, *, n_s, sc, s_total, strip, inv_s,
                use_mxu):
    """Grid = (row tiles [parallel], S chunks [arbitrary])."""
    k = pl.program_id(1)

    @pl.when(k == 0)
    def _init():
        acc_ref[...] = jnp.zeros_like(acc_ref)

    if use_mxu:
        _accum_chunk_mxu(x_ref, acc_ref, sc=sc)
    else:
        tail = s_total - (n_s - 1) * sc          # valid lanes in the last chunk
        if tail == sc:
            # Every chunk is full: single unmasked path.
            _accum_chunk_vpu(x_ref, acc_ref, groups=sc // _LANE, rem=0,
                             strip=strip)
        else:
            @pl.when(k < n_s - 1)
            def _full_chunk():
                _accum_chunk_vpu(x_ref, acc_ref, groups=sc // _LANE, rem=0,
                                 strip=strip)

            @pl.when(k == n_s - 1)
            def _tail_chunk():
                # Tail geometry is static: unmasked full groups + one masked
                # partial group; fully-invalid groups are never touched.
                _accum_chunk_vpu(x_ref, acc_ref, groups=tail // _LANE,
                                 rem=tail % _LANE, strip=strip)

    @pl.when(k == n_s - 1)
    def _finalize():
        if use_mxu:
            col = acc_ref[:, 0:1]                # every lane holds the row sum
        else:
            col = jnp.sum(acc_ref[...], axis=-1, keepdims=True)
        o_ref[...] = (col * inv_s).astype(o_ref.dtype)


def gap(x: jax.Array) -> jax.Array:
    """Mean over the last two axes of a 5-D array (B, C, D, H, W) -> (B, C, D)."""
    assert x.ndim == 5, "GAP expects a 5-D input (B, C, D, H, W)"
    B, C, D, H, W = x.shape
    M, S = B * C * D, H * W
    # No-copy flatten; NO jnp.pad: ragged tiles are handled in-kernel (masked
    # lane tail) or by Pallas' clamped ragged blocks (row tail), so the input
    # is read from HBM exactly once.
    x2 = x.reshape(M, S)

    elem = jnp.dtype(x.dtype).itemsize
    vmem_limit = _vmem_limit_bytes()
    n_cores = _num_tensorcores()
    tm, sc = _choose_tiles(M, S, elem, vmem_limit, n_cores)
    n_m = pl.cdiv(M, tm)
    n_s = pl.cdiv(S, sc)
    strip = _STRIP if tm % _STRIP == 0 else _SUBLANE
    use_mxu = (x.dtype == jnp.bfloat16) and (S % sc == 0)

    kernel = functools.partial(
        _gap_kernel, n_s=n_s, sc=sc, s_total=S, strip=strip,
        inv_s=1.0 / float(S), use_mxu=use_mxu)

    out2 = pl.pallas_call(
        kernel,
        out_shape=jax.ShapeDtypeStruct((M, 1), x.dtype),
        grid=(n_m, n_s),
        in_specs=[pl.BlockSpec((tm, sc), lambda i, k: (i, k))],
        out_specs=pl.BlockSpec((tm, 1), lambda i, k: (i, 0)),
        scratch_shapes=[pltpu.VMEM((tm, _LANE), jnp.float32)],
        compiler_params=pltpu.CompilerParams(
            dimension_semantics=("parallel", "arbitrary"),
            vmem_limit_bytes=vmem_limit,
        ),
        cost_estimate=pl.CostEstimate(
            flops=M * S,
            transcendentals=0,
            bytes_accessed=M * S * elem + M * elem,
        ),
    )(x2)

    return out2.reshape(B, C, D)


if __name__ == "__main__":
    key = jax.random.PRNGKey(0)
    cases = [
        ((2, 4, 8, 16, 16), jnp.float32),   # M=64 (< one row tile), S=256
        ((4, 8, 16, 16, 16), jnp.float32),  # M=512, S=256
        ((3, 7, 13, 14, 14), jnp.float32),  # S=196: masked lane tail; ragged M
        ((1, 2, 8, 48, 48), jnp.float32),   # S=2304: two S-chunks, full tail
        ((1, 2, 8, 50, 50), jnp.float32),   # S=2500: two S-chunks + masked rem
        ((2, 4, 8, 16, 16), jnp.bfloat16),  # bf16 -> MXU lane-reduction path
    ]
    for idx, (shp, dt) in enumerate(cases):
        k = jax.random.fold_in(key, idx)
        x = jax.random.normal(k, shp, dtype=jnp.float32).astype(dt)
        out = jax.block_until_ready(gap(x))
        ref = jnp.mean(x.astype(jnp.float32), axis=(3, 4)).astype(dt)
        assert out.shape == ref.shape, f"shape mismatch for {shp} {dt}"
        tol = 1e-5 if dt == jnp.float32 else 2e-2
        assert jnp.allclose(out.astype(jnp.float32), ref.astype(jnp.float32),
                            atol=tol, rtol=tol), f"value mismatch for {shp} {dt}"
    print("KERNEL_OK")
</pallas_src>

<mosaic_0001>
module attributes {stable_mosaic.version = 11 : i64} {
  func.func @_gap_kernel(%arg0: i32, %arg1: i32, %arg2: memref<128x256xf32, #tpu.memory_space<vmem>>, %arg3: memref<128x1xf32, #tpu.memory_space<vmem>>, %arg4: memref<128x128xf32, #tpu.memory_space<vmem>>) attributes {dimension_semantics = [#tpu.dimension_semantics<parallel>, #tpu.dimension_semantics<arbitrary>], iteration_bounds = array<i64: 1, 1>, scalar_prefetch = 0 : i64, scratch_operands = 1 : i64, tpu.core_type = #tpu.core_type<tc>, window_params = [{transform_indices = @transform_0, window_bounds = array<i64: 128, 256>}, {transform_indices = @transform_1, window_bounds = array<i64: 128, 1>}]} {
    %c0_i32 = arith.constant 0 : i32
    %0 = arith.cmpi eq, %arg1, %c0_i32 : i32
    %1 = arith.extui %0 : i1 to i32
    %c0_i32_0 = arith.constant 0 : i32
    %2 = arith.cmpi ne, %1, %c0_i32_0 : i32
    scf.if %2 {
      %cst = arith.constant 0.000000e+00 : f32
      %7 = vector.broadcast %cst : f32 to vector<128x128xf32>
      %c0 = arith.constant 0 : index
      %c0_5 = arith.constant 0 : index
      %8 = vector.load %arg4[%c0, %c0_5] : memref<128x128xf32, #tpu.memory_space<vmem>>, vector<128x128xf32>
      tpu.vector_store %arg4[%c0, %c0_5], %7 {strides = array<i32>} : memref<128x128xf32, #tpu.memory_space<vmem>>, vector<128x128xf32>,
    } else {
    }
    %c0_i32_1 = arith.constant 0 : i32
    %c2_i32 = arith.constant 2 : i32
    %3 = arith.addi %c0_i32_1, %c2_i32 : i32
    %c1_i32 = arith.constant 1 : i32
    scf.for %arg5 = %c0_i32_1 to %3 step %c1_i32  : i32 {
      %c64_i32 = arith.constant 64 : i32
      %7 = arith.muli %arg5, %c64_i32 : i32
      %8 = tpu.assume_multiple %7, 64 : i32
      %9 = arith.index_cast %8 : i32 to index
      %c0 = arith.constant 0 : index
      %10 = vector.load %arg2[%9, %c0] : memref<128x256xf32, #tpu.memory_space<vmem>>, vector<64x128xf32>
      %11 = arith.index_cast %8 : i32 to index
      %c128 = arith.constant 128 : index
      %12 = vector.load %arg2[%11, %c128] : memref<128x256xf32, #tpu.memory_space<vmem>>, vector<64x128xf32>
      %13 = arith.addf %10, %12 : vector<64x128xf32>
      %14 = arith.index_cast %8 : i32 to index
      %c0_5 = arith.constant 0 : index
      %15 = vector.load %arg4[%14, %c0_5] : memref<128x128xf32, #tpu.memory_space<vmem>>, vector<64x128xf32>
      %16 = arith.addf %15, %13 : vector<64x128xf32>
      %17 = arith.index_cast %8 : i32 to index
      %c0_6 = arith.constant 0 : index
      %18 = vector.load %arg4[%17, %c0_6] : memref<128x128xf32, #tpu.memory_space<vmem>>, vector<64x128xf32>
      tpu.vector_store %arg4[%17, %c0_6], %16 {strides = array<i32>} : memref<128x128xf32, #tpu.memory_space<vmem>>, vector<64x128xf32>,
    }
    %c2_i32_2 = arith.constant 2 : i32
    %c0_i32_3 = arith.constant 0 : i32
    %4 = arith.cmpi eq, %arg1, %c0_i32_3 : i32
    %5 = arith.extui %4 : i1 to i32
    %c0_i32_4 = arith.constant 0 : i32
    %6 = arith.cmpi ne, %5, %c0_i32_4 : i32
    scf.if %6 {
      %c0 = arith.constant 0 : index
      %c0_5 = arith.constant 0 : index
      %7 = vector.load %arg4[%c0, %c0_5] : memref<128x128xf32, #tpu.memory_space<vmem>>, vector<128x128xf32>
      %cst = arith.constant dense<0.000000e+00> : vector<128xf32>
      %8 = vector.multi_reduction <add>, %7, %cst [1] : vector<128x128xf32> to vector<128xf32>
      %9 = vector.shape_cast %8 : vector<128xf32> to vector<128x1xf32>
      %cst_6 = arith.constant 3.906250e-03 : f32
      %10 = vector.broadcast %cst_6 : f32 to vector<128x1xf32>
      %11 = arith.mulf %9, %10 : vector<128x1xf32>
      %c0_7 = arith.constant 0 : index
      %c0_8 = arith.constant 0 : index
      %12 = vector.load %arg3[%c0_7, %c0_8] : memref<128x1xf32, #tpu.memory_space<vmem>>, vector<128x1xf32>
      tpu.vector_store %arg3[%c0_7, %c0_8], %11 {strides = array<i32>} : memref<128x1xf32, #tpu.memory_space<vmem>>, vector<128x1xf32>,
    } else {
    }
    return
  }
  func.func @transform_0(%arg0: i32, %arg1: i32) -> (i32, i32) {
    %c0_i32 = arith.constant 0 : i32
    return %arg0, %arg1 : i32, i32
  }
  func.func @transform_1(%arg0: i32, %arg1: i32) -> (i32, i32) {
    %c0_i32 = arith.constant 0 : i32
    %c0_i32_0 = arith.constant 0 : i32
    return %arg0, %c0_i32 : i32, i32
  }
}

</mosaic_0001>

<llo_original>
// kernel: tpu_custom_call.1
$region0: #{tpu_custom_call.1}
  #allocation0 [shape = 'u32[]', space=smem, size = 0x4, offset = 0x4, fixed_abs, tag = 'smem constant byte address 0x4 - core index']
  #allocation1 [shape = 'u32[144,128]{1,0:T(1,128)}', space=vmem, size = 0x12000, scoped, tag = 'internal scratch']
  #allocation2 [shape = 'f32[128,128]{1,0:T(8,128)}', space=vmem, size = 0x10000, scoped, tag = 'scratch operand']
  %s0 = inlined_call_operand.hbm [shape: f32[64,256], index: 0, kind: input, shape index: {}]
  %s1 = inlined_call_operand.vmem [shape: f32[64,1], index: 1, kind: output, shape index: {}]
  %s2 = sld [smem:[#allocation0]]
  $region67: #{tpu_custom_call.1} parent=0
    _
  %s4 = ssub.s32 1, %s2
  %s5 = scalar_select 0, %s4, %s2
  $region1: #{tpu_custom_call.1} parent=0
    #allocation3 [shape = 'u8[131072]{0}', space=vmem, size = 0x20000, scoped, tag = 'input window, operand 0, single buffered']
    #allocation4 [shape = 's32[1]{0}', space=sflag, size = 0x4, scoped, tag = 'scoped memory for tpu_custom_call.1']
    #allocation5 [shape = 'u8[65536]{0}', space=vmem, size = 0x10000, scoped, tag = 'output window, operand 0, single buffered']
    %6 = vsyncpa [#allocation4], 0
    // Predicated region
    $region2: #{tpu_custom_call.1} parent=1 // pred_check
      _
    $region3: #{tpu_custom_call.1} parent=1 // pred_check_branch
      %8 = sbr.rel (0) target = $region5
    $region4: #{tpu_custom_call.1} parent=1 // pred_region
      %s10 = ssub.s32 4096, 2048
      %11 = vsyncadd [#allocation4], %s10
      %s12 = sshll.u32 [#allocation3], 4
      %s13 = int_to_ptr.vmem [resolvable:$true] %s12
      %18 = dma.hbm_to_vmem [thread:$0]  %s0, 2048, %s13, [#allocation4], 256, 256, 16
    $region5: #{tpu_custom_call.1} parent=1 // pred_fallthru
      _
    // Predicated region
    $region6: #{tpu_custom_call.1} parent=1 // pred_check
      _
    $region7: #{tpu_custom_call.1} parent=1 // pred_check_branch
      %20 = sbr.rel (0) target = $region9
    $region8: #{tpu_custom_call.1} parent=1 // pred_region
      %21 = dma.done [#allocation4], 4096
    $region9: #{tpu_custom_call.1} parent=1 // pred_fallthru
      _
    %p22 = scmp.eq.s32.totalorder 0, 0
    // Predicated region
    $region10: #{tpu_custom_call.1} parent=1 // pred_check
      %p23 = pneg %p22
    $region11: #{tpu_custom_call.1} parent=1 // pred_check_branch
      %25 = sbr.rel (%p23) target = $region13
    $region12: #{tpu_custom_call.1} parent=1 // pred_region
      %26 = vst [vmem:[#allocation2] sm:$0xff] 0.0
      %27 = vst [vmem:[#allocation2 + $0x8] sm:$0xff] 0.0
      %28 = vst [vmem:[#allocation2 + $0x10] sm:$0xff] 0.0
      %29 = vst [vmem:[#allocation2 + $0x18] sm:$0xff] 0.0
      %30 = vst [vmem:[#allocation2 + $0x20] sm:$0xff] 0.0
      %31 = vst [vmem:[#allocation2 + $0x28] sm:$0xff] 0.0
      %32 = vst [vmem:[#allocation2 + $0x30] sm:$0xff] 0.0
      %33 = vst [vmem:[#allocation2 + $0x38] sm:$0xff] 0.0
      %34 = vst [vmem:[#allocation2 + $0x40] sm:$0xff] 0.0
      %35 = vst [vmem:[#allocation2 + $0x48] sm:$0xff] 0.0
      %36 = vst [vmem:[#allocation2 + $0x50] sm:$0xff] 0.0
      %37 = vst [vmem:[#allocation2 + $0x58] sm:$0xff] 0.0
      %38 = vst [vmem:[#allocation2 + $0x60] sm:$0xff] 0.0
      %39 = vst [vmem:[#allocation2 + $0x68] sm:$0xff] 0.0
      %40 = vst [vmem:[#allocation2 + $0x70] sm:$0xff] 0.0
      %41 = vst [vmem:[#allocation2 + $0x78] sm:$0xff] 0.0
    $region13: #{tpu_custom_call.1} parent=1 // pred_fallthru
      _
    loop: start=0, step=1, limit=2
    $region14: #{tpu_custom_call.1} parent=1 // loop_pre_header
      _
    $region15: #{tpu_custom_call.1} parent=1 // loop_header
      %s43 = sphi 0, %s47
      %p44 = scmp.ge.s32.totalorder %s43, 2
    $region16: #{tpu_custom_call.1} parent=1 // loop_header_branch
      %46 = sbr.rel (%p44) target = $region20
    $region17: #{tpu_custom_call.1} parent=1 // loop_body
      %s48 = smul.u32 %s43, 64
      %s49 = sshra.s32 %s48, 3
      %s50 = sand.u32 %s48, 7
      %s51 = smul.u32 %s49, 2
      %s52 = smul.addr %s51, 8
      %s53 = scalar_lea.vmem [#allocation3], %s52
      %v54 = vld [vmem:[%s53] sm:$0xff]
      %v55 = vld [vmem:[%s53 + $0x10] sm:$0xff]
      %v56 = vld [vmem:[%s53 + $0x20] sm:$0xff]
      %v57 = vld [vmem:[%s53 + $0x30] sm:$0xff]
      %v58 = vld [vmem:[%s53 + $0x40] sm:$0xff]
      %v59 = vld [vmem:[%s53 + $0x50] sm:$0xff]
      %v60 = vld [vmem:[%s53 + $0x60] sm:$0xff]
      %v61 = vld [vmem:[%s53 + $0x70] sm:$0xff]
      %v62 = vld [vmem:[%s53 + $0x8] sm:$0xff]
      %v63 = vld [vmem:[%s53 + $0x18] sm:$0xff]
      %v64 = vld [vmem:[%s53 + $0x28] sm:$0xff]
      %v65 = vld [vmem:[%s53 + $0x38] sm:$0xff]
      %v66 = vld [vmem:[%s53 + $0x48] sm:$0xff]
      %v67 = vld [vmem:[%s53 + $0x58] sm:$0xff]
      %v68 = vld [vmem:[%s53 + $0x68] sm:$0xff]
      %v69 = vld [vmem:[%s53 + $0x78] sm:$0xff]
      %v70 = vadd.f32 %v54, %v62
      %v71 = vadd.f32 %v55, %v63
      %v72 = vadd.f32 %v56, %v64
      %v73 = vadd.f32 %v57, %v65
      %v74 = vadd.f32 %v58, %v66
      %v75 = vadd.f32 %v59, %v67
      %v76 = vadd.f32 %v60, %v68
      %v77 = vadd.f32 %v61, %v69
      %s78 = scalar_lea.vmem [#allocation2], %s48
      %v79 = vld [vmem:[%s78] sm:$0xff]
      %v80 = vld [vmem:[%s78 + $0x8] sm:$0xff]
      %v81 = vld [vmem:[%s78 + $0x10] sm:$0xff]
      %v82 = vld [vmem:[%s78 + $0x18] sm:$0xff]
      %v83 = vld [vmem:[%s78 + $0x20] sm:$0xff]
      %v84 = vld [vmem:[%s78 + $0x28] sm:$0xff]
      %v85 = vld [vmem:[%s78 + $0x30] sm:$0xff]
      %v86 = vld [vmem:[%s78 + $0x38] sm:$0xff]
      %v87 = vadd.f32 %v79, %v70
      %v88 = vadd.f32 %v80, %v71
      %v89 = vadd.f32 %v81, %v72
      %v90 = vadd.f32 %v82, %v73
      %v91 = vadd.f32 %v83, %v74
      %v92 = vadd.f32 %v84, %v75
      %v93 = vadd.f32 %v85, %v76
      %v94 = vadd.f32 %v86, %v77
      %95 = vst [vmem:[%s78] sm:$0xff] %v87
      %96 = vst [vmem:[%s78 + $0x8] sm:$0xff] %v88
      %97 = vst [vmem:[%s78 + $0x10] sm:$0xff] %v89
      %98 = vst [vmem:[%s78 + $0x18] sm:$0xff] %v90
      %99 = vst [vmem:[%s78 + $0x20] sm:$0xff] %v91
      %100 = vst [vmem:[%s78 + $0x28] sm:$0xff] %v92
      %101 = vst [vmem:[%s78 + $0x30] sm:$0xff] %v93
      %102 = vst [vmem:[%s78 + $0x38] sm:$0xff] %v94
    $region18: #{tpu_custom_call.1} parent=1 // loop_footer
      %s47 = sadd.s32 1, %s43
    $region19: #{tpu_custom_call.1} parent=1 // loop_footer_branch
      %42 = sbr.rel target = $region15
    $region20: #{tpu_custom_call.1} parent=1 // loop_exit
      _
    // Predicated region
    $region21: #{tpu_custom_call.1} parent=1 // pred_check
      %p103 = pneg %p22
    $region22: #{tpu_custom_call.1} parent=1 // pred_check_branch
      %105 = sbr.rel (%p103) target = $region24
    $region23: #{tpu_custom_call.1} parent=1 // pred_region
      %v106 = vld [vmem:[#allocation2] sm:$0xff]
      %v107 = vld [vmem:[#allocation2 + $0x8] sm:$0xff]
      %v108 = vld [vmem:[#allocation2 + $0x10] sm:$0xff]
      %v109 = vld [vmem:[#allocation2 + $0x18] sm:$0xff]
      %v110 = vld [vmem:[#allocation2 + $0x20] sm:$0xff]
      %v111 = vld [vmem:[#allocation2 + $0x28] sm:$0xff]
      %v112 = vld [vmem:[#allocation2 + $0x30] sm:$0xff]
      %v113 = vld [vmem:[#allocation2 + $0x38] sm:$0xff]
      %v114 = vld [vmem:[#allocation2 + $0x40] sm:$0xff]
      %v115 = vld [vmem:[#allocation2 + $0x48] sm:$0xff]
      %v116 = vld [vmem:[#allocation2 + $0x50] sm:$0xff]
      %v117 = vld [vmem:[#allocation2 + $0x58] sm:$0xff]
      %v118 = vld [vmem:[#allocation2 + $0x60] sm:$0xff]
      %v119 = vld [vmem:[#allocation2 + $0x68] sm:$0xff]
      %v120 = vld [vmem:[#allocation2 + $0x70] sm:$0xff]
      %v121 = vld [vmem:[#allocation2 + $0x78] sm:$0xff]
      %122 = vadd.xlane.f32.xlu0 %v106
      %v123 = vpop.xlane.xlu0 %122
      %124 = vadd.xlane.f32.xlu0 %v107
      %v125 = vpop.xlane.xlu0 %124
      %126 = vadd.xlane.f32.xlu0 %v108
      %v127 = vpop.xlane.xlu0 %126
      %128 = vadd.xlane.f32.xlu0 %v109
      %v129 = vpop.xlane.xlu0 %128
      %130 = vadd.xlane.f32.xlu0 %v110
      %v131 = vpop.xlane.xlu0 %130
      %132 = vadd.xlane.f32.xlu0 %v111
      %v133 = vpop.xlane.xlu0 %132
      %134 = vadd.xlane.f32.xlu0 %v112
      %v135 = vpop.xlane.xlu0 %134
      %136 = vadd.xlane.f32.xlu0 %v113
      %v137 = vpop.xlane.xlu0 %136
      %138 = vadd.xlane.f32.xlu0 %v114
      %v139 = vpop.xlane.xlu0 %138
      %140 = vadd.xlane.f32.xlu0 %v115
      %v141 = vpop.xlane.xlu0 %140
      %142 = vadd.xlane.f32.xlu0 %v116
      %v143 = vpop.xlane.xlu0 %142
      %144 = vadd.xlane.f32.xlu0 %v117
      %v145 = vpop.xlane.xlu0 %144
      %146 = vadd.xlane.f32.xlu0 %v118
      %v147 = vpop.xlane.xlu0 %146
      %148 = vadd.xlane.f32.xlu0 %v119
      %v149 = vpop.xlane.xlu0 %148
      %150 = vadd.xlane.f32.xlu0 %v120
      %v151 = vpop.xlane.xlu0 %150
      %152 = vadd.xlane.f32.xlu0 %v121
      %v153 = vpop.xlane.xlu0 %152
      %v154 = vmul.f32 %v123, 0.00390625
      %v155 = vmul.f32 %v125, 0.00390625
      %v156 = vmul.f32 %v127, 0.00390625
      %v157 = vmul.f32 %v129, 0.00390625
      %v158 = vmul.f32 %v131, 0.00390625
      %v159 = vmul.f32 %v133, 0.00390625
      %v160 = vmul.f32 %v135, 0.00390625
      %v161 = vmul.f32 %v137, 0.00390625
      %v162 = vmul.f32 %v139, 0.00390625
      %v163 = vmul.f32 %v141, 0.00390625
      %v164 = vmul.f32 %v143, 0.00390625
      %v165 = vmul.f32 %v145, 0.00390625
      %v166 = vmul.f32 %v147, 0.00390625
      %v167 = vmul.f32 %v149, 0.00390625
      %v168 = vmul.f32 %v151, 0.00390625
      %v169 = vmul.f32 %v153, 0.00390625
      %vm170 = vcmask 7168
      %171 = vst.msk [vmem:[#allocation5] sm:$0xff] %vm170, %v154
      %172 = vst.msk [vmem:[#allocation5 + $0x8] sm:$0xff] %vm170, %v155
      %173 = vst.msk [vmem:[#allocation5 + $0x10] sm:$0xff] %vm170, %v156
      %174 = vst.msk [vmem:[#allocation5 + $0x18] sm:$0xff] %vm170, %v157
      %175 = vst.msk [vmem:[#allocation5 + $0x20] sm:$0xff] %vm170, %v158
      %176 = vst.msk [vmem:[#allocation5 + $0x28] sm:$0xff] %vm170, %v159
      %177 = vst.msk [vmem:[#allocation5 + $0x30] sm:$0xff] %vm170, %v160
      %178 = vst.msk [vmem:[#allocation5 + $0x38] sm:$0xff] %vm170, %v161
      %179 = vst.msk [vmem:[#allocation5 + $0x40] sm:$0xff] %vm170, %v162
      %180 = vst.msk [vmem:[#allocation5 + $0x48] sm:$0xff] %vm170, %v163
      %181 = vst.msk [vmem:[#allocation5 + $0x50] sm:$0xff] %vm170, %v164
      %182 = vst.msk [vmem:[#allocation5 + $0x58] sm:$0xff] %vm170, %v165
      %183 = vst.msk [vmem:[#allocation5 + $0x60] sm:$0xff] %vm170, %v166
      %184 = vst.msk [vmem:[#allocation5 + $0x68] sm:$0xff] %vm170, %v167
      %185 = vst.msk [vmem:[#allocation5 + $0x70] sm:$0xff] %vm170, %v168
      %186 = vst.msk [vmem:[#allocation5 + $0x78] sm:$0xff] %vm170, %v169
    $region24: #{tpu_custom_call.1} parent=1 // pred_fallthru
      _
    // Predicated region
    $region25: #{tpu_custom_call.1} parent=1 // pred_check
      _
    $region26: #{tpu_custom_call.1} parent=1 // pred_check_branch
      %188 = sbr.rel (0) target = $region28
    $region27: #{tpu_custom_call.1} parent=1 // pred_region
      // Predicated region
      $region29: #{tpu_custom_call.1} parent=27 // pred_check
        _
      $region30: #{tpu_custom_call.1} parent=27 // pred_check_branch
        %190 = sbr.rel (0) target = $region32
      $region31: #{tpu_custom_call.1} parent=27 // pred_region
        // Predicated region
        $region33: #{tpu_custom_call.1} parent=31 // pred_check
          _
        $region34: #{tpu_custom_call.1} parent=31 // pred_check_branch
          %192 = sbr.rel (0) target = $region36
        $region35: #{tpu_custom_call.1} parent=31 // pred_region
          // Predicated region
          $region48: #{tpu_custom_call.1} parent=35 // pred_check
            _
          $region49: #{tpu_custom_call.1} parent=35 // pred_check_branch
            %222 = sbr.rel (0) target = $region51
          $region50: #{tpu_custom_call.1} parent=35 // pred_region
            loop: start=0, step=1, limit=1
            $region52: #{tpu_custom_call.1} parent=50 // loop_pre_header
              _
            $region53: #{tpu_custom_call.1} parent=50 // loop_header
              %s224 = sphi 0, %s228
              %p225 = scmp.ge.s32.totalorder %s224, 1
              %s229 = sphi [#allocation5], [#allocation5]
              %s230 = sphi %s1, %s1
            $region54: #{tpu_custom_call.1} parent=50 // loop_header_branch
              %227 = sbr.rel (%p225) target = $region58
            $region55: #{tpu_custom_call.1} parent=50 // loop_body
              %v231 = vld [vmem:[%s229] sm:$0xff]
              %232 = vst [vmem:[%s230] sm:$0xff] %v231
              %v233 = vld [vmem:[%s229 + $0x8] sm:$0xff]
              %234 = vst [vmem:[%s230 + $0x8] sm:$0xff] %v233
              %v235 = vld [vmem:[%s229 + $0x10] sm:$0xff]
              %236 = vst [vmem:[%s230 + $0x10] sm:$0xff] %v235
              %v237 = vld [vmem:[%s229 + $0x18] sm:$0xff]
              %238 = vst [vmem:[%s230 + $0x18] sm:$0xff] %v237
              %v239 = vld [vmem:[%s229 + $0x20] sm:$0xff]
              %240 = vst [vmem:[%s230 + $0x20] sm:$0xff] %v239
              %v241 = vld [vmem:[%s229 + $0x28] sm:$0xff]
              %242 = vst [vmem:[%s230 + $0x28] sm:$0xff] %v241
              %v243 = vld [vmem:[%s229 + $0x30] sm:$0xff]
              %244 = vst [vmem:[%s230 + $0x30] sm:$0xff] %v243
              %v245 = vld [vmem:[%s229 + $0x38] sm:$0xff]
              %246 = vst [vmem:[%s230 + $0x38] sm:$0xff] %v245
            $region56: #{tpu_custom_call.1} parent=50 // loop_footer
              %s228 = sadd.s32 1, %s224
            $region57: #{tpu_custom_call.1} parent=50 // loop_footer_branch
              %223 = sbr.rel target = $region53
            $region58: #{tpu_custom_call.1} parent=50 // loop_exit
              _
          $region51: #{tpu_custom_call.1} parent=35 // pred_fallthru
            _
          // Predicated region
          $region59: #{tpu_custom_call.1} parent=35 // pred_check
            _
          $region60: #{tpu_custom_call.1} parent=35 // pred_check_branch
            %248 = sbr.rel target = $region62
          $region61: #{tpu_custom_call.1} parent=35 // pred_region
            _
          $region62: #{tpu_custom_call.1} parent=35 // pred_fallthru
            _
        $region36: #{tpu_custom_call.1} parent=31 // pred_fallthru
          _
        // Predicated region
        $region37: #{tpu_custom_call.1} parent=31 // pred_check
          _
        $region38: #{tpu_custom_call.1} parent=31 // pred_check_branch
          %194 = sbr.rel target = $region40
        $region39: #{tpu_custom_call.1} parent=31 // pred_region
          %s196 = ssub.s32 256, 1
          loop: start=0, step=1, limit=1
          $region41: #{tpu_custom_call.1} parent=39 // loop_pre_header
            _
          $region42: #{tpu_custom_call.1} parent=39 // loop_header
            %s198 = sphi 0, %s202
            %p199 = scmp.ge.s32.totalorder %s198, 1
            %s203 = sphi [#allocation5], [#allocation5]
            %s204 = sphi %s1, %s1
          $region43: #{tpu_custom_call.1} parent=39 // loop_header_branch
            %201 = sbr.rel (%p199) target = $region47
          $region44: #{tpu_custom_call.1} parent=39 // loop_body
            %v205 = vld [vmem:[%s203] sm:%s196]
            %206 = vst [vmem:[%s204] sm:%s196] %v205
            %v207 = vld [vmem:[%s203 + $0x8] sm:%s196]
            %208 = vst [vmem:[%s204 + $0x8] sm:%s196] %v207
            %v209 = vld [vmem:[%s203 + $0x10] sm:%s196]
            %210 = vst [vmem:[%s204 + $0x10] sm:%s196] %v209
            %v211 = vld [vmem:[%s203 + $0x18] sm:%s196]
            %212 = vst [vmem:[%s204 + $0x18] sm:%s196] %v211
            %v213 = vld [vmem:[%s203 + $0x20] sm:%s196]
            %214 = vst [vmem:[%s204 + $0x20] sm:%s196] %v213
            %v215 = vld [vmem:[%s203 + $0x28] sm:%s196]
            %216 = vst [vmem:[%s204 + $0x28] sm:%s196] %v215
            %v217 = vld [vmem:[%s203 + $0x30] sm:%s196]
            %218 = vst [vmem:[%s204 + $0x30] sm:%s196] %v217
            %v219 = vld [vmem:[%s203 + $0x38] sm:%s196]
            %220 = vst [vmem:[%s204 + $0x38] sm:%s196] %v219
          $region45: #{tpu_custom_call.1} parent=39 // loop_footer
            %s202 = sadd.s32 1, %s198
          $region46: #{tpu_custom_call.1} parent=39 // loop_footer_branch
            %197 = sbr.rel target = $region42
          $region47: #{tpu_custom_call.1} parent=39 // loop_exit
            _
        $region40: #{tpu_custom_call.1} parent=31 // pred_fallthru
          _
      $region32: #{tpu_custom_call.1} parent=27 // pred_fallthru
        _
      %249 = vnop
    $region28: #{tpu_custom_call.1} parent=1 // pred_fallthru
      _
    // Predicated region
    $region63: #{tpu_custom_call.1} parent=1 // pred_check
      _
    $region64: #{tpu_custom_call.1} parent=1 // pred_check_branch
      %251 = sbr.rel (0) target = $region66
    $region65: #{tpu_custom_call.1} parent=1 // pred_region
      _
    $region66: #{tpu_custom_call.1} parent=1 // pred_fallthru
      _
    %252 = vsyncpa [#allocation4], 1

</llo_original>
